<compile_context>
chip_gen: v7x
topology: tpu7x:2x2x1
jax: 0.10.0
libtpu: 0.0.40
codegen_flags: <defaults>
</compile_context>

<pallas_src>
import functools

import jax
import jax.numpy as jnp
from jax.experimental import pallas as pl
from jax.experimental.pallas import tpu as pltpu


def _round_up(x: int, m: int) -> int:
    return ((x + m - 1) // m) * m


def _ctc_head_kernel(x_ref, w_ref, b_ref, o_ref):
    # MXU matmul with f32 accumulation + f32 bias broadcast-add, single store.
    acc = jnp.dot(x_ref[...], w_ref[...], preferred_element_type=jnp.float32)
    o_ref[...] = (acc + b_ref[...]).astype(o_ref.dtype)
    # TODO(synk): if the deployed CTCHead applies log_softmax at inference,
    # fuse it here (mask padded cols to -inf, EUP exp + pl.reciprocal) -- the
    # EUP/XLU slots are idle in this DMA-bound kernel.


def prepack_ctc_head_params(weight, bias, compute_dtype=None):
    """One-time prepack of PyTorch-layout params.

    weight: (num_classes, C_in) -> (C_in, N_pad)  transposed, zero-padded,
            optionally cast to `compute_dtype` (e.g. bf16 to halve HBM reads).
    bias:   (num_classes,)      -> (1, N_pad)     zero-padded, kept f32
            (added after the f32 accumulation).
    N_pad = round_up(num_classes, 128) so every output store is lane-dense.
    """
    num_classes, c_in = weight.shape
    n_pad = _round_up(num_classes, 128)
    w_dtype = weight.dtype if compute_dtype is None else compute_dtype
    w_packed = jnp.zeros((c_in, n_pad), dtype=w_dtype)
    w_packed = w_packed.at[:, :num_classes].set(weight.T.astype(w_dtype))
    b_packed = jnp.zeros((1, n_pad), dtype=jnp.float32)
    b_packed = b_packed.at[:, :num_classes].set(bias.astype(jnp.float32))
    return w_packed, b_packed


@functools.partial(jax.jit, static_argnames=("num_classes", "trim_classes"))
def ctc_head_forward(x, w_packed, b_packed, *, num_classes, trim_classes=True):
    """x: (B, T, C_in); w_packed: (C_in, N_pad); b_packed: (1, N_pad).

    Returns (B, T, num_classes) logits (module semantics).  With
    trim_classes=False the 128-padded (B, T, N_pad) layout is returned
    directly, skipping the post-kernel column-slice copy (padded classes are
    exactly `bias_pad == 0` and can be masked by the consumer).
    """
    B, T, C_in = x.shape
    N_pad = w_packed.shape[1]
    M = B * T
    out_dtype = x.dtype

    # Cast activations to the packed-weight compute dtype (bf16 path).
    if x.dtype != w_packed.dtype:
        x = x.astype(w_packed.dtype)
    itemsize = jnp.dtype(x.dtype).itemsize
    sub = 8 if itemsize >= 4 else 16  # sublane multiple (f32 / bf16)

    # --- M tiling: large tiles amortize the ~0.35us per-step overhead, but
    # keep >= 2 grid steps so "parallel" can use both v7x TensorCores.
    TM = min(2048, _round_up(M, sub))
    while TM > sub and pl.cdiv(M, TM) < 2:
        TM = _round_up(TM // 2, sub)

    # --- N tiling: only needed for large vocabularies where resident W plus
    # double-buffered x/out tiles would blow the scoped-VMEM default
    # (16 MiB v5e / 32 MiB v6e+v7x).  Budget kept under v5e's default.
    def _footprint(tm, tn):
        return (itemsize * 2 * tm * C_in          # double-buffered x tile
                + itemsize * 2 * tm * tn          # double-buffered out tile
                + itemsize * 2 * C_in * tn        # weight block
                + 4 * 2 * tn)                     # f32 bias block

    VMEM_BUDGET = 12 << 20
    TN = N_pad
    while TN > 512 and _footprint(TM, TN) > VMEM_BUDGET:
        TN = _round_up(TN // 2, 128)
    while TM > 4 * sub and _footprint(TM, TN) > VMEM_BUDGET:
        TM = _round_up(TM // 2, sub)

    grid = (pl.cdiv(M, TM), pl.cdiv(N_pad, TN))

    # No jnp.pad: ragged last M tile is handled by the pipeline emitter
    # (reads past the end are padded, writes past the end are masked).
    x2d = x.reshape(M, C_in)

    cost = pl.CostEstimate(
        flops=2 * M * C_in * N_pad,
        transcendentals=0,
        bytes_accessed=itemsize * (M * C_in + C_in * N_pad + M * N_pad)
        + 4 * N_pad,
    )

    out2d = pl.pallas_call(
        _ctc_head_kernel,
        out_shape=jax.ShapeDtypeStruct((M, N_pad), out_dtype),
        grid_spec=pltpu.PrefetchScalarGridSpec(
            num_scalar_prefetch=0,
            grid=grid,
            in_specs=[
                # Streaming activations: one (TM, C_in) tile per m-step; the
                # block index is constant across the (inner) n axis so the
                # pipeline skips redundant re-DMA.
                pl.BlockSpec((TM, C_in), lambda i, j: (i, 0)),
                # Weight + bias: constant across m -> effectively resident.
                pl.BlockSpec((C_in, TN), lambda i, j: (0, j)),
                pl.BlockSpec((1, TN), lambda i, j: (0, j)),
            ],
            out_specs=pl.BlockSpec((TM, TN), lambda i, j: (i, j)),
        ),
        compiler_params=pltpu.CompilerParams(
            # Both axes are independent (full C_in reduction inside the body),
            # so either can be sharded across v7x's two TensorCores.
            dimension_semantics=("parallel", "parallel"),
        ),
        cost_estimate=cost,
    )(x2d, w_packed, b_packed)

    if trim_classes and num_classes != N_pad:
        out2d = out2d[:, :num_classes]
    return out2d.reshape(B, T, out2d.shape[1])


def _reference(x, weight, bias):
    # Same semantics as nn.Linear / F.linear over the last dim.
    return jnp.einsum("btc,nc->btn", x, weight,
                      preferred_element_type=jnp.float32) + bias


if __name__ == "__main__":
    key = jax.random.PRNGKey(0)

    # --- test 1: small shapes -----------------------------------------------
    B, T, C_in, num_classes = 2, 8, 32, 16
    kx, kw, kb, key = jax.random.split(key, 4)
    bound = 1.0 / (C_in ** 0.5)
    x = jax.random.normal(kx, (B, T, C_in), dtype=jnp.float32)
    weight = jax.random.uniform(kw, (num_classes, C_in), minval=-bound,
                                maxval=bound, dtype=jnp.float32)
    bias = jax.random.uniform(kb, (num_classes,), minval=-bound, maxval=bound,
                              dtype=jnp.float32)

    w_packed, b_packed = prepack_ctc_head_params(weight, bias)  # one-time
    out = ctc_head_forward(x, w_packed, b_packed, num_classes=num_classes)
    out = jax.block_until_ready(out)
    ref = _reference(x, weight, bias)
    assert out.shape == (B, T, num_classes)
    assert jnp.allclose(out, ref, atol=1e-5, rtol=1e-5)

    # --- test 2: M tiling (grid_m = 2) + ragged last row-tile + column pad ---
    B2, T2, C_in2, num_classes2 = 3, 200, 64, 37
    kx2, kw2, kb2, key = jax.random.split(key, 4)
    bound2 = 1.0 / (C_in2 ** 0.5)
    x2 = jax.random.normal(kx2, (B2, T2, C_in2), dtype=jnp.float32)
    weight2 = jax.random.uniform(kw2, (num_classes2, C_in2), minval=-bound2,
                                 maxval=bound2, dtype=jnp.float32)
    bias2 = jax.random.uniform(kb2, (num_classes2,), minval=-bound2,
                               maxval=bound2, dtype=jnp.float32)

    w_packed2, b_packed2 = prepack_ctc_head_params(weight2, bias2)
    out2 = ctc_head_forward(x2, w_packed2, b_packed2, num_classes=num_classes2)
    out2 = jax.block_until_ready(out2)
    ref2 = _reference(x2, weight2, bias2)
    assert out2.shape == (B2, T2, num_classes2)
    assert jnp.allclose(out2, ref2, atol=1e-5, rtol=1e-5)

    # --- test 3: bf16 fast path (halved HBM reads), untrimmed padded output --
    B3, T3, C_in3, num_classes3 = 2, 64, 128, 256
    kx3, kw3, kb3, key = jax.random.split(key, 4)
    bound3 = 1.0 / (C_in3 ** 0.5)
    x3 = jax.random.normal(kx3, (B3, T3, C_in3), dtype=jnp.float32)
    weight3 = jax.random.uniform(kw3, (num_classes3, C_in3), minval=-bound3,
                                 maxval=bound3, dtype=jnp.float32)
    bias3 = jax.random.uniform(kb3, (num_classes3,), minval=-bound3,
                               maxval=bound3, dtype=jnp.float32)

    w_packed3, b_packed3 = prepack_ctc_head_params(
        weight3, bias3, compute_dtype=jnp.bfloat16)
    x3_bf16 = x3.astype(jnp.bfloat16)
    out3 = ctc_head_forward(x3_bf16, w_packed3, b_packed3,
                            num_classes=num_classes3)
    out3 = jax.block_until_ready(out3)
    ref3 = (jnp.einsum("btc,nc->btn", x3_bf16, weight3.astype(jnp.bfloat16),
                       preferred_element_type=jnp.float32)
            + bias3).astype(jnp.bfloat16)
    assert out3.shape == (B3, T3, num_classes3)
    assert jnp.allclose(out3.astype(jnp.float32), ref3.astype(jnp.float32),
                        atol=5e-2, rtol=5e-2)

    print("KERNEL_OK")
</pallas_src>

<mosaic_0001>
module attributes {stable_mosaic.version = 11 : i64} {
  func.func @_ctc_head_kernel(%arg0: i32, %arg1: i32, %arg2: memref<8x32xf32, #tpu.memory_space<vmem>>, %arg3: memref<32x128xf32, #tpu.memory_space<vmem>>, %arg4: memref<1x128xf32, #tpu.memory_space<vmem>>, %arg5: memref<8x128xf32, #tpu.memory_space<vmem>>) attributes {dimension_semantics = [#tpu.dimension_semantics<parallel>, #tpu.dimension_semantics<parallel>], iteration_bounds = array<i64: 2, 1>, scalar_prefetch = 0 : i64, scratch_operands = 0 : i64, tpu.core_type = #tpu.core_type<tc>, window_params = [{transform_indices = @transform_0, window_bounds = array<i64: 8, 32>}, {transform_indices = @transform_1, window_bounds = array<i64: 32, 128>}, {transform_indices = @transform_2, window_bounds = array<i64: 1, 128>}, {transform_indices = @transform_3, window_bounds = array<i64: 8, 128>}]} {
    %c0 = arith.constant 0 : index
    %c0_0 = arith.constant 0 : index
    %0 = vector.load %arg2[%c0, %c0_0] : memref<8x32xf32, #tpu.memory_space<vmem>>, vector<8x32xf32>
    %c0_1 = arith.constant 0 : index
    %c0_2 = arith.constant 0 : index
    %1 = vector.load %arg3[%c0_1, %c0_2] : memref<32x128xf32, #tpu.memory_space<vmem>>, vector<32x128xf32>
    %cst = arith.constant dense<0.000000e+00> : vector<8x128xf32>
    %2 = tpu.matmul %0, %1, %cst {dimension_numbers = #tpu.dot_dimension_numbers<[1], [0], [0], [1], [0, 0, 1, 1], [], []>} : vector<8x32xf32>, vector<32x128xf32>, vector<8x128xf32> -> vector<8x128xf32>
    %c0_3 = arith.constant 0 : index
    %c0_4 = arith.constant 0 : index
    %3 = vector.load %arg4[%c0_3, %c0_4] : memref<1x128xf32, #tpu.memory_space<vmem>>, vector<1x128xf32>
    %4 = vector.broadcast %3 : vector<1x128xf32> to vector<8x128xf32>
    %5 = arith.addf %2, %4 : vector<8x128xf32>
    %c0_5 = arith.constant 0 : index
    %c0_6 = arith.constant 0 : index
    %6 = vector.load %arg5[%c0_5, %c0_6] : memref<8x128xf32, #tpu.memory_space<vmem>>, vector<8x128xf32>
    tpu.vector_store %arg5[%c0_5, %c0_6], %5 {strides = array<i32>} : memref<8x128xf32, #tpu.memory_space<vmem>>, vector<8x128xf32>,
    return
  }
  func.func @transform_0(%arg0: i32, %arg1: i32) -> (i32, i32) {
    %c0_i32 = arith.constant 0 : i32
    %c0_i32_0 = arith.constant 0 : i32
    return %arg0, %c0_i32 : i32, i32
  }
  func.func @transform_1(%arg0: i32, %arg1: i32) -> (i32, i32) {
    %c0_i32 = arith.constant 0 : i32
    %c0_i32_0 = arith.constant 0 : i32
    return %c0_i32, %arg1 : i32, i32
  }
  func.func @transform_2(%arg0: i32, %arg1: i32) -> (i32, i32) {
    %c0_i32 = arith.constant 0 : i32
    %c0_i32_0 = arith.constant 0 : i32
    return %c0_i32, %arg1 : i32, i32
  }
  func.func @transform_3(%arg0: i32, %arg1: i32) -> (i32, i32) {
    %c0_i32 = arith.constant 0 : i32
    return %arg0, %arg1 : i32, i32
  }
}

</mosaic_0001>

<llo_original>
// kernel: ctc_head_forward.1
$region0: #{ctc_head_forward.1}
  #allocation0 [shape = 'u32[]', space=smem, size = 0x4, offset = 0x4, fixed_abs, tag = 'smem constant byte address 0x4 - core index']
  #allocation1 [shape = 'u32[144,128]{1,0:T(1,128)}', space=vmem, size = 0x12000, scoped, tag = 'internal scratch']
  %s0 = inlined_call_operand.hbm [shape: f32[16,32], index: 0, kind: input, shape index: {}]
  %s1 = inlined_call_operand.hbm [shape: f32[32,128], index: 1, kind: input, shape index: {}]
  %s2 = inlined_call_operand.vmem [shape: f32[1,128], index: 2, kind: input, shape index: {}]
  %s3 = inlined_call_operand.vmem [shape: f32[16,128], index: 3, kind: output, shape index: {}]
  %s4 = sld [smem:[#allocation0]]
  $region53: #{ctc_head_forward.1} parent=0
    _
  %s6 = ssub.s32 1, %s4
  %s7 = scalar_select 0, %s6, %s4
  $region1: #{ctc_head_forward.1} parent=0
    #allocation2 [shape = 'u8[8192]{0}', space=vmem, size = 0x2000, scoped, tag = 'input window, operand 0']
    #allocation3 [shape = 's32[2]{0}', space=sflag, size = 0x8, scoped, tag = 'scoped memory for ctc_head_forward.1']
    #allocation4 [shape = 'u8[16384]{0}', space=vmem, size = 0x4000, scoped, tag = 'input window, operand 1, single buffered']
    #allocation5 [shape = 's32[1]{0}', space=sflag, size = 0x4, scoped, tag = 'scoped memory for ctc_head_forward.1']
    %8 = vsyncpa [#allocation3], 0
    %s9 = scalar_lea.sflag [#allocation3], 1
    %10 = vsyncpa %s9, 0
    %11 = vsyncpa [#allocation5], 0
    loop: start=0, step=1, limit=4
    $region2: #{ctc_head_forward.1} parent=1 // loop_pre_header
      _
    $region3: #{ctc_head_forward.1} parent=1 // loop_header
      %s13 = sphi 0, %s17
      %p14 = scmp.ge.s32.totalorder %s13, 4
      %s20 = sphi 0, %s32
      %s21 = sphi 0, %s28
      %s22 = sphi 0, %s20
      %s23 = sphi 0, %s21
      %s24 = sphi 0, %s22
      %s25 = sphi 0, %s23
      %s35 = sphi 0, %s37
      %s38 = sphi 0, %s35
      %s39 = sphi 0, %s38
      %s55 = sphi 0, %s39
      %s61 = sphi 0, %s63
      %s64 = sphi 0, %s61
      %s65 = sphi 0, %s64
      %s81 = sphi 0, %s65
      %s87 = sphi 0, %s89
      %s90 = sphi 0, %s87
      %s91 = sphi 0, %s90
      %s107 = sphi 0, %s91
      %s115 = sphi 0, %s117
      %s118 = sphi 0, %s115
      %s119 = sphi 0, %s118
      %s135 = sphi 0, %s119
    $region4: #{ctc_head_forward.1} parent=1 // loop_header_branch
      %16 = sbr.rel (%p14) target = $region8
    $region5: #{ctc_head_forward.1} parent=1 // loop_body
      %s18 = ssub.s32 %s13, 1
      %s19 = ssub.s32 %s13, 2
      %s26 = sadd.s32 1, %s21
      %p27 = scmp.ge.s32.totalorder %s26, 1
      %s28 = scalar_select %p27, 0, %s26
      %s29 = sadd.s32 1, %s20
      %s30 = scalar_select %p27, %s29, %s20
      %p31 = scmp.ge.s32.totalorder %s30, 2
      %s32 = scalar_select %p31, 0, %s30
      %s33 = ssub.s32 %s20, %s32
      %p34 = scmp.eq.s32.totalorder %s33, 0
      %s36 = sadd.s32 %s35, 1
      %s37 = scalar_select %p34, %s35, %s36
      %p40 = pneg %p34
      %p41 = scmp.eq.s32.totalorder %s13, 1
      %p42 = por %p40, %p41
      %p43 = scmp.ne.s32.totalorder %s35, %s38
      %p44 = scmp.eq.s32.totalorder %s13, 0
      %p45 = por %p43, %p44
      %p46 = scmp.ne.s32.totalorder %s35, %s38
      %p47 = scmp.eq.s32.totalorder %s18, 1
      %p48 = por %p46, %p47
      %p49 = scmp.ne.s32.totalorder %s38, %s39
      %p50 = scmp.eq.s32.totalorder %s18, 0
      %p51 = por %p49, %p50
      %p52 = scmp.ne.s32.totalorder %s38, %s39
      %p53 = scmp.eq.s32.totalorder %s19, 1
      %p54 = por %p52, %p53
      %p56 = scmp.ne.s32.totalorder %s39, %s55
      %p57 = scmp.eq.s32.totalorder %s19, 0
      %p58 = por %p56, %p57
      %s59 = ssub.s32 %s21, %s28
      %p60 = scmp.eq.s32.totalorder %s59, 0
      %s62 = sadd.s32 %s61, 1
      %s63 = scalar_select %p60, %s61, %s62
      %p66 = pneg %p60
      %p67 = scmp.eq.s32.totalorder %s13, 1
      %p68 = por %p66, %p67
      %p69 = scmp.ne.s32.totalorder %s61, %s64
      %p70 = scmp.eq.s32.totalorder %s13, 0
      %p71 = por %p69, %p70
      %p72 = scmp.ne.s32.totalorder %s61, %s64
      %p73 = scmp.eq.s32.totalorder %s18, 1
      %p74 = por %p72, %p73
      %p75 = scmp.ne.s32.totalorder %s64, %s65
      %p76 = scmp.eq.s32.totalorder %s18, 0
      %p77 = por %p75, %p76
      %p78 = scmp.ne.s32.totalorder %s64, %s65
      %p79 = scmp.eq.s32.totalorder %s19, 1
      %p80 = por %p78, %p79
      %p82 = scmp.ne.s32.totalorder %s65, %s81
      %p83 = scmp.eq.s32.totalorder %s19, 0
      %p84 = por %p82, %p83
      %s85 = ssub.s32 %s21, %s28
      %p86 = scmp.eq.s32.totalorder %s85, 0
      %s88 = sadd.s32 %s87, 1
      %s89 = scalar_select %p86, %s87, %s88
      %p92 = pneg %p86
      %p93 = scmp.eq.s32.totalorder %s13, 1
      %p94 = por %p92, %p93
      %p95 = scmp.ne.s32.totalorder %s87, %s90
      %p96 = scmp.eq.s32.totalorder %s13, 0
      %p97 = por %p95, %p96
      %p98 = scmp.ne.s32.totalorder %s87, %s90
      %p99 = scmp.eq.s32.totalorder %s18, 1
      %p100 = por %p98, %p99
      %p101 = scmp.ne.s32.totalorder %s90, %s91
      %p102 = scmp.eq.s32.totalorder %s18, 0
      %p103 = por %p101, %p102
      %p104 = scmp.ne.s32.totalorder %s90, %s91
      %p105 = scmp.eq.s32.totalorder %s19, 1
      %p106 = por %p104, %p105
      %p108 = scmp.ne.s32.totalorder %s91, %s107
      %p109 = scmp.eq.s32.totalorder %s19, 0
      %p110 = por %p108, %p109
      %s111 = ssub.s32 %s20, %s32
      %s112 = ssub.s32 %s21, %s28
      %s113 = sor.u32 %s111, %s112
      %p114 = scmp.eq.s32.totalorder %s113, 0
      %s116 = sadd.s32 %s115, 1
      %s117 = scalar_select %p114, %s115, %s116
      %p120 = pneg %p114
      %p121 = scmp.eq.s32.totalorder %s13, 1
      %p122 = por %p120, %p121
      %p123 = scmp.ne.s32.totalorder %s115, %s118
      %p124 = scmp.eq.s32.totalorder %s13, 0
      %p125 = por %p123, %p124
      %p126 = scmp.ne.s32.totalorder %s115, %s118
      %p127 = scmp.eq.s32.totalorder %s18, 1
      %p128 = por %p126, %p127
      %p129 = scmp.ne.s32.totalorder %s118, %s119
      %p130 = scmp.eq.s32.totalorder %s18, 0
      %p131 = por %p129, %p130
      %p132 = scmp.ne.s32.totalorder %s118, %s119
      %p133 = scmp.eq.s32.totalorder %s19, 1
      %p134 = por %p132, %p133
      %p136 = scmp.ne.s32.totalorder %s119, %s135
      %p137 = scmp.eq.s32.totalorder %s19, 0
      %p138 = por %p136, %p137
      %p139 = scmp.le.s32.totalorder 1, %s13
      %p140 = scmp.lt.s32.totalorder %s13, 3
      %p141 = pnand %p139, %p140
      %p142 = pneg %p141
      // Predicated region
      $region9: #{ctc_head_forward.1} parent=5 // pred_check
        _
      $region10: #{ctc_head_forward.1} parent=5 // pred_check_branch
        %144 = sbr.rel (%p141) target = $region12
      $region11: #{ctc_head_forward.1} parent=5 // pred_region
        %s145 = ssub.s32 %s13, 1
        // Predicated region
        $region13: #{ctc_head_forward.1} parent=11 // pred_check
          %p146 = pneg %p77
        $region14: #{ctc_head_forward.1} parent=11 // pred_check_branch
          %148 = sbr.rel (%p146) target = $region16
        $region15: #{ctc_head_forward.1} parent=11 // pred_region
          %s150 = ssub.s32 512, 512
          %151 = vsyncadd [#allocation5], %s150
          %s152 = smul.addr %s23, 128
          %s153 = scalar_lea.hbm %s1, %s152
          %s154 = sshll.u32 [#allocation4], 4
          %s155 = int_to_ptr.vmem [resolvable:$true] %s154
          %160 = dma.hbm_to_vmem [thread:$0]  %s153, 512, %s155, [#allocation5], 128, 128, 8
        $region16: #{ctc_head_forward.1} parent=11 // pred_fallthru
          _
        // Predicated region
        $region17: #{ctc_head_forward.1} parent=11 // pred_check
          %p161 = pneg %p103
        $region18: #{ctc_head_forward.1} parent=11 // pred_check_branch
          %163 = sbr.rel (%p161) target = $region20
        $region19: #{ctc_head_forward.1} parent=11 // pred_region
          %p164 = scmp.lt.s32.totalorder %s23, 0
          %s165 = scalar_select %p164, %s23, 0
          %s166 = scalar_lea.vmem %s2, %s165
        $region20: #{ctc_head_forward.1} parent=11 // pred_fallthru
          _
      $region12: #{ctc_head_forward.1} parent=5 // pred_fallthru
        _
      %p167 = scmp.lt.s32.totalorder %s13, 2
      // Predicated region
      $region21: #{ctc_head_forward.1} parent=5 // pred_check
        %p168 = pneg %p167
      $region22: #{ctc_head_forward.1} parent=5 // pred_check_branch
        %170 = sbr.rel (%p168) target = $region24
      $region23: #{ctc_head_forward.1} parent=5 // pred_region
        // Predicated region
        $region25: #{ctc_head_forward.1} parent=23 // pred_check
          %p171 = pneg %p45
        $region26: #{ctc_head_forward.1} parent=23 // pred_check_branch
          %173 = sbr.rel (%p171) target = $region28
        $region27: #{ctc_head_forward.1} parent=23 // pred_region
          %s174 = sand.u32 %s35, 1
          %s175 = scalar_lea.sflag [#allocation3], %s174
          %s176 = sand.u32 %s35, 1
          %s177 = smul.addr %s176, 8
          %s178 = scalar_lea.vmem [#allocation2], %s177
          %s180 = ssub.s32 128, 128
          %181 = vsyncadd %s175, %s180
          %s182 = smul.addr %s20, 128
          %s183 = scalar_lea.hbm %s0, %s182
          %s185 = sshll.u32 %s178, 4
          %s186 = int_to_ptr.vmem [resolvable:$true] %s185
          %188 = dma.hbm_to_vmem [thread:$0]  %s183, 128, %s186, %s175
        $region28: #{ctc_head_forward.1} parent=23 // pred_fallthru
          _
      $region24: #{ctc_head_forward.1} parent=5 // pred_fallthru
        _
      %p189 = scmp.le.s32.totalorder 1, %s13
      %p190 = scmp.lt.s32.totalorder %s13, 3
      %p191 = pnand %p189, %p190
      %p192 = pneg %p191
      // Predicated region
      $region29: #{ctc_head_forward.1} parent=5 // pred_check
        _
      $region30: #{ctc_head_forward.1} parent=5 // pred_check_branch
        %194 = sbr.rel (%p191) target = $region32
      $region31: #{ctc_head_forward.1} parent=5 // pred_region
        %s195 = ssub.s32 %s13, 1
        %s196 = sand.u32 %s38, 1
        %s197 = scalar_lea.sflag [#allocation3], %s196
        %s198 = sand.u32 %s38, 1
        %s199 = smul.addr %s198, 8
        %s200 = scalar_lea.vmem [#allocation2], %s199
        // Predicated region
        $region33: #{ctc_head_forward.1} parent=31 // pred_check
          %p201 = pneg %p51
        $region34: #{ctc_head_forward.1} parent=31 // pred_check_branch
          %203 = sbr.rel (%p201) target = $region36
        $region35: #{ctc_head_forward.1} parent=31 // pred_region
          %204 = dma.done %s197, 128
        $region36: #{ctc_head_forward.1} parent=31 // pred_fallthru
          _
        // Predicated region
        $region37: #{ctc_head_forward.1} parent=31 // pred_check
          %p205 = pneg %p77
        $region38: #{ctc_head_forward.1} parent=31 // pred_check_branch
          %207 = sbr.rel (%p205) target = $region40
        $region39: #{ctc_head_forward.1} parent=31 // pred_region
          %208 = dma.done [#allocation5], 512
        $region40: #{ctc_head_forward.1} parent=31 // pred_fallthru
          _
        %s209 = sand.u32 %s38, 1
        %s210 = scalar_lea.sflag [#allocation3], %s209
        %s211 = sand.u32 %s38, 1
        %s212 = smul.addr %s211, 8
        %s213 = scalar_lea.vmem [#allocation2], %s212
        %p214 = pneg %p51
        %p215 = pneg %p48
        %p216 = pneg %p77
        %p217 = pneg %p74
        %p218 = scmp.lt.s32.totalorder %s23, 0
        %s219 = scalar_select %p218, %s23, 0
        %s220 = scalar_lea.vmem %s2, %s219
        %p221 = pneg %p103
        %p222 = pneg %p100
        %p223 = pneg %p131
        %p224 = pneg %p128
        %p225 = scmp.lt.s32.totalorder %s22, 1
        %s226 = scalar_select %p225, %s22, 1
        %p227 = scmp.lt.s32.totalorder %s23, 0
        %s228 = scalar_select %p227, %s23, 0
        %s229 = sadd.s32 %s228, %s226
        %s230 = smul.addr %s229, 8
        %s231 = scalar_lea.vmem %s3, %s230
        %p232 = scmp.lt.s32.totalorder %s23, 0
        %s233 = scalar_select %p232, %s23, 0
        %s234 = scalar_lea.vmem %s2, %s233
        %p235 = scmp.lt.s32.totalorder %s22, 1
        %s236 = scalar_select %p235, %s22, 1
        %p237 = scmp.lt.s32.totalorder %s23, 0
        %s238 = scalar_select %p237, %s23, 0
        %s239 = sadd.s32 %s238, %s236
        %s240 = smul.addr %s239, 8
        %s241 = scalar_lea.vmem %s3, %s240
        %v242 = vld [vmem:[%s200] sm:$0xff]
        %v243 = vld [vmem:[#allocation4] sm:$0xff]
        %v244 = vld [vmem:[#allocation4 + $0x8] sm:$0xff]
        %v245 = vld [vmem:[#allocation4 + $0x10] sm:$0xff]
        %v246 = vld [vmem:[#allocation4 + $0x18] sm:$0xff]
        %v247 = vld [vmem:[%s234] sm:$0x1]
        %v249 = vlaneseq
        %v250 = vshrl.u32 %v249, 7
        %v251 = vsub.s32 0, %v250
        %v252 = vrot.slane %v247, %v251
        %vm254 = vcmask 261120
        %v256 = vsel %vm254, %v242, 0
        %258 = vmatprep.subr.mxu0 0.0
        %259 = vmatpush1.msra.mxu0 %v243
        %260 = vmatprep.subr.mxu0 0.0
        %261 = vmatpush1.msra.mxu0 %v244
        %262 = vmatprep.subr.mxu0 0.0
        %263 = vmatpush1.msra.mxu0 %v245
        %264 = vmatprep.subr.mxu0 0.0
        %265 = vmatpush1.msra.mxu0 %v246
        %266 = vmatprep.subr.mxu0 0.0
        %267 = vmatpush1.msra.mxu0 0.0
        %268 = vmatprep.subr.mxu0 0.0
        %269 = vmatpush1.msra.mxu0 0.0
        %270 = vmatprep.subr.mxu0 0.0
        %271 = vmatpush1.msra.mxu0 0.0
        %272 = vmatprep.subr.mxu0 0.0
        %273 = vmatpush1.msra.mxu0 0.0
        %274 = vmatprep.subr.mxu0 0.0
        %275 = vmatpush1.msra.mxu0 0.0
        %276 = vmatprep.subr.mxu0 0.0
        %277 = vmatpush1.msra.mxu0 0.0
        %278 = vmatprep.subr.mxu0 0.0
        %279 = vmatpush1.msra.mxu0 0.0
        %280 = vmatprep.subr.mxu0 0.0
        %281 = vmatpush1.msra.mxu0 0.0
        %282 = vmatprep.subr.mxu0 0.0
        %283 = vmatpush1.msra.mxu0 0.0
        %284 = vmatprep.subr.mxu0 0.0
        %285 = vmatpush1.msra.mxu0 0.0
        %286 = vmatprep.subr.mxu0 0.0
        %287 = vmatpush1.msra.mxu0 0.0
        %288 = vmatprep.subr.mxu0 0.0
        %289 = vmatpush1.msra.mxu0 0.0
        %290 = vmatprep.subr.mxu0 0.0
        %291 = vmatpush1.msra.mxu0 0.0
        %292 = vmatprep.subr.mxu0 0.0
        %293 = vmatpush1.msra.mxu0 0.0
        %294 = vmatprep.subr.mxu0 0.0
        %295 = vmatpush1.msra.mxu0 0.0
        %296 = vmatprep.subr.mxu0 0.0
        %297 = vmatpush1.msra.mxu0 0.0
        %298 = vmatprep.subr.mxu0 0.0
        %299 = vmatpush1.msra.mxu0 0.0
        %300 = vmatprep.subr.mxu0 0.0
        %301 = vmatpush1.msra.mxu0 0.0
        %302 = vmatprep.subr.mxu0 0.0
        %303 = vmatpush1.msra.mxu0 0.0
        %304 = vmatprep.subr.mxu0 0.0
        %305 = vmatpush1.msra.mxu0 0.0
        %306 = vmatprep.subr.mxu0 0.0
        %307 = vmatpush1.msra.mxu0 0.0
        %308 = vmatprep.subr.mxu0 0.0
        %309 = vmatpush1.msra.mxu0 0.0
        %310 = vmatprep.subr.mxu0 0.0
        %311 = vmatpush1.msra.mxu0 0.0
        %312 = vmatprep.subr.mxu0 0.0
        %313 = vmatpush1.msra.mxu0 0.0
        %314 = vmatprep.subr.mxu0 0.0
        %315 = vmatpush1.msra.mxu0 0.0
        %316 = vmatprep.subr.mxu0 0.0
        %317 = vmatpush1.msra.mxu0 0.0
        %318 = vmatprep.subr.mxu0 0.0
        %319 = vmatpush1.msra.mxu0 0.0
        %320 = vmatprep.subr.mxu0 0.0
        %321 = vmatpush1.msra.mxu0 0.0
        %322 = vmatprep.mubr.f32.mxu0 0.0
        %323 = vmatmul.mubr.f32.gmra.mrb[0].mxu0 %v256
        %v324 = vpop.f32.mrb[0].mxu0
        %v325 = vadd.f32 %v252, %v324
        %v326 = vpop.f32.mrb[0].mxu0
        %327 = vdwg.mxu0
        %328 = vst [vmem:[%s241] sm:$0xff] %v325
        %p329 = scmp.lt.s32.totalorder %s22, 1
        %s330 = scalar_select %p329, %s22, 1
        %p331 = scmp.lt.s32.totalorder %s23, 0
        %s332 = scalar_select %p331, %s23, 0
        %s333 = sadd.s32 %s332, %s330
        %s334 = smul.addr %s333, 8
        %s335 = scalar_lea.vmem %s3, %s334
        // Predicated region
        $region41: #{ctc_head_forward.1} parent=31 // pred_check
          %p336 = pneg %p128
        $region42: #{ctc_head_forward.1} parent=31 // pred_check_branch
          %338 = sbr.rel (%p336) target = $region44
        $region43: #{ctc_head_forward.1} parent=31 // pred_region
          _
        $region44: #{ctc_head_forward.1} parent=31 // pred_fallthru
          _
      $region32: #{ctc_head_forward.1} parent=5 // pred_fallthru
        _
      %p339 = scmp.le.s32.totalorder 2, %s13
      // Predicated region
      $region45: #{ctc_head_forward.1} parent=5 // pred_check
        %p340 = pneg %p339
      $region46: #{ctc_head_forward.1} parent=5 // pred_check_branch
        %342 = sbr.rel (%p340) target = $region48
      $region47: #{ctc_head_forward.1} parent=5 // pred_region
        %s343 = ssub.s32 %s13, 2
        // Predicated region
        $region49: #{ctc_head_forward.1} parent=47 // pred_check
          %p344 = pneg %p134
        $region50: #{ctc_head_forward.1} parent=47 // pred_check_branch
          %346 = sbr.rel (%p344) target = $region52
        $region51: #{ctc_head_forward.1} parent=47 // pred_region
          %p347 = scmp.lt.s32.totalorder %s24, 1
          %s348 = scalar_select %p347, %s24, 1
          %p349 = scmp.lt.s32.totalorder %s25, 0
          %s350 = scalar_select %p349, %s25, 0
          %s351 = sadd.s32 %s350, %s348
          %s352 = smul.addr %s351, 8
          %s353 = scalar_lea.vmem %s3, %s352
        $region52: #{ctc_head_forward.1} parent=47 // pred_fallthru
          _
      $region48: #{ctc_head_forward.1} parent=5 // pred_fallthru
        _
    $region6: #{ctc_head_forward.1} parent=1 // loop_footer
      %s17 = sadd.s32 1, %s13
    $region7: #{ctc_head_forward.1} parent=1 // loop_footer_branch
      %12 = sbr.rel target = $region3
    $region8: #{ctc_head_forward.1} parent=1 // loop_exit
      _
    %354 = vsyncpa [#allocation3], 1
    %s355 = scalar_lea.sflag [#allocation3], 1
    %356 = vsyncpa %s355, 1
    %357 = vsyncpa [#allocation5], 1

</llo_original>
